<compile_context>
chip_gen: v5e
topology: v5e:2x2
jax: 0.10.0
libtpu: 0.0.40
codegen_flags: <defaults>
</compile_context>

<pallas_src>
import math

import jax
import jax.numpy as jnp
from jax.experimental import pallas as pl
from jax.experimental.pallas import tpu as pltpu


def _round_up(x: int, m: int) -> int:
    return ((x + m - 1) // m) * m


def _make_controller_kernel(nout: int, epsilon: float):
    """Build the fused Controller kernel for static (nout, epsilon)."""
    eps = float(epsilon)

    def kernel(h_ref, w_ref, b_ref, u_ref, out_ref):
        h = h_ref[...]            # (TM, In)  f32
        w = w_ref[...]            # nout==1: (1, In) native layout, else (In, Out)
        b = b_ref[...]            # (1, Out)  f32
        u = u_ref[...]            # (TM, Out) uniforms in [0, 1)

        if nout == 1:
            # Out == 1: skip the MXU — VPU multiply + lane reduction.
            z = jnp.sum(h * w, axis=-1, keepdims=True)                 # (TM, 1)
        else:
            # Weight pre-transposed to (In, Out) in the wrapper: plain MXU
            # (M, K) x (K, N) contraction, no in-kernel transpose.
            z = jnp.dot(h, w, preferred_element_type=jnp.float32)      # (TM, Out)
        z = z + b

        # sigmoid (EUP exp + VPU div), then epsilon exploration mix (f32 only).
        p = 1.0 / (1.0 + jnp.exp(-z))
        p = (1.0 - eps) * p + eps * 0.05

        # Bernoulli sample via uniform comparison.
        take = u < p
        action = take.astype(jnp.float32)
        log_p = jnp.log(p)
        log_pi = jnp.where(take, log_p, jnp.log(1.0 - p))

        # One full-block store, packed along a new leading (major) axis:
        #   out[0]=action, out[1]=log_pi, out[2]=-log(probs)
        out_ref[...] = jnp.stack([action, log_pi, -log_p], axis=0)     # (3, TM, Out)

    return kernel


def controller_forward(h, weight, bias, key, epsilon=0.0, block_rows=512):
    """Fused Controller.forward.

    h:      (..., ninp)      hidden state; leading dims (e.g. T, B) are flattened
                             so one rollout costs ONE pallas_call.
    weight: (nout, ninp)     nn.Linear weight (PyTorch layout).
    bias:   (nout,)          nn.Linear bias.
    key:    jax PRNG key for the Bernoulli draw (caller must advance per step).
    Returns (action, log_pi, -log(probs)), each (..., nout) float32.
    """
    h = jnp.asarray(h, jnp.float32)
    weight = jnp.asarray(weight, jnp.float32)
    bias = jnp.asarray(bias, jnp.float32)

    *lead, in_dim = h.shape
    M = int(math.prod(lead)) if lead else 1
    Out = int(weight.shape[0])
    h2 = h.reshape(M, in_dim)

    # Uniforms drawn once outside the kernel (portable; no TPU-only PRNG prims).
    u = jax.random.uniform(key, (M, Out), dtype=jnp.float32)

    # Weight layout: native (1, In) for the Out==1 VPU path; pre-transposed
    # (In, Out) once here for the MXU path.
    w_arg = weight if Out == 1 else weight.T
    b_arg = bias.reshape(1, Out)

    # Row tile: whole batch in one step when small; stream rows when large.
    tm = min(int(block_rows), _round_up(M, 8))
    mp = _round_up(M, tm)
    if mp != M:
        h2 = jnp.pad(h2, ((0, mp - M), (0, 0)))
        u = jnp.pad(u, ((0, mp - M), (0, 0)), constant_values=1.0)
    grid = (mp // tm,)

    stacked = pl.pallas_call(
        _make_controller_kernel(Out, float(epsilon)),
        out_shape=jax.ShapeDtypeStruct((3, mp, Out), jnp.float32),
        grid=grid,
        in_specs=[
            pl.BlockSpec((tm, in_dim), lambda i: (i, 0)),       # h rows stream
            pl.BlockSpec(w_arg.shape, lambda i: (0, 0)),        # W VMEM-resident
            pl.BlockSpec((1, Out), lambda i: (0, 0)),           # bias resident
            pl.BlockSpec((tm, Out), lambda i: (i, 0)),          # uniforms stream
        ],
        out_specs=pl.BlockSpec((3, tm, Out), lambda i: (0, i, 0)),
        compiler_params=pltpu.CompilerParams(
            dimension_semantics=("parallel",),   # v7x: shard row loop over 2 TCs
        ),
        cost_estimate=pl.CostEstimate(
            flops=2 * mp * in_dim * Out + 16 * mp * Out,
            transcendentals=3 * mp * Out,
            bytes_accessed=4 * (mp * in_dim + Out * in_dim + Out
                                + mp * Out + 3 * mp * Out),
        ),
    )(h2, w_arg, b_arg, u)

    out_shape = tuple(lead) + (Out,)
    action = stacked[0, :M].reshape(out_shape)
    log_pi = stacked[1, :M].reshape(out_shape)
    neg_log_p = stacked[2, :M].reshape(out_shape)
    return action, log_pi, neg_log_p


def _init_linear_params(key, in_features, out_features, dtype=jnp.float32):
    # nn.Linear default init: U(-1/sqrt(in), 1/sqrt(in))
    kw, kb = jax.random.split(key)
    bound = 1.0 / (in_features ** 0.5)
    weight = jax.random.uniform(kw, (out_features, in_features),
                                minval=-bound, maxval=bound, dtype=dtype)
    bias = jax.random.uniform(kb, (out_features,),
                              minval=-bound, maxval=bound, dtype=dtype)
    return weight, bias


if __name__ == "__main__":
    key = jax.random.PRNGKey(0)
    k_h, k_p, k_s, k_h2, k_s2 = jax.random.split(key, 5)

    batch = 8
    ninp = 32      # controller hidden size
    nout = 1       # one halting probability
    epsilon = 0.05

    h = jax.random.normal(k_h, (batch, ninp), dtype=jnp.float32)
    weight, bias = _init_linear_params(k_p, ninp, nout)

    fwd = jax.jit(controller_forward, static_argnames=("epsilon",))
    action, log_pi, neg_log_p = fwd(h, weight, bias, k_s, epsilon=epsilon)
    jax.block_until_ready((action, log_pi, neg_log_p))

    # Reference (fully deterministic now: uniforms are drawn with the same key).
    logits = h @ weight.T + bias
    probs = 1.0 / (1.0 + jnp.exp(-logits))
    probs = (1.0 - epsilon) * probs + epsilon * 0.05
    u_ref = jax.random.uniform(k_s, (batch, nout), dtype=jnp.float32)
    action_ref = (u_ref < probs).astype(jnp.float32)

    assert action.shape == (batch, nout)
    assert log_pi.shape == (batch, nout)
    assert neg_log_p.shape == (batch, nout)
    assert bool(jnp.all((action == 0.0) | (action == 1.0)))
    assert bool(jnp.array_equal(action, action_ref))
    assert jnp.allclose(neg_log_p, -jnp.log(probs), atol=1e-5, rtol=1e-5)
    exp_log_pi = jnp.where(action > 0.5, jnp.log(probs), jnp.log(1.0 - probs))
    assert jnp.allclose(log_pi, exp_log_pi, atol=1e-5, rtol=1e-5)

    # Amortized rollout call: (T, B, ninp) flattened to one launch by the wrapper.
    T = 5
    h_seq = jax.random.normal(k_h2, (T, batch, ninp), dtype=jnp.float32)
    a2, lp2, nl2 = fwd(h_seq, weight, bias, k_s2, epsilon=epsilon)
    jax.block_until_ready((a2, lp2, nl2))
    assert a2.shape == (T, batch, nout)
    assert lp2.shape == (T, batch, nout)
    assert nl2.shape == (T, batch, nout)
    assert bool(jnp.all((a2 == 0.0) | (a2 == 1.0)))

    print("KERNEL_OK")
</pallas_src>

<mosaic_0001>
module attributes {stable_mosaic.version = 11 : i64} {
  func.func @kernel(%arg0: i32, %arg1: memref<8x32xf32, #tpu.memory_space<vmem>>, %arg2: memref<1x32xf32, #tpu.memory_space<vmem>>, %arg3: memref<1x1xf32, #tpu.memory_space<vmem>>, %arg4: memref<8x1xf32, #tpu.memory_space<vmem>>, %arg5: memref<3x8x1xf32, #tpu.memory_space<vmem>>) attributes {dimension_semantics = [#tpu.dimension_semantics<parallel>], iteration_bounds = array<i64: 1>, scalar_prefetch = 0 : i64, scratch_operands = 0 : i64, tpu.core_type = #tpu.core_type<tc>, window_params = [{transform_indices = @transform_0, window_bounds = array<i64: 8, 32>}, {pipeline_mode = #tpu.pipeline_mode<synchronous>, transform_indices = @transform_1, window_bounds = array<i64: 1, 32>}, {pipeline_mode = #tpu.pipeline_mode<synchronous>, transform_indices = @transform_2, window_bounds = array<i64: 1, 1>}, {transform_indices = @transform_3, window_bounds = array<i64: 8, 1>}, {transform_indices = @transform_4, window_bounds = array<i64: 3, 8, 1>}]} {
    %c0 = arith.constant 0 : index
    %c0_0 = arith.constant 0 : index
    %0 = vector.load %arg1[%c0, %c0_0] : memref<8x32xf32, #tpu.memory_space<vmem>>, vector<8x32xf32>
    %c0_1 = arith.constant 0 : index
    %c0_2 = arith.constant 0 : index
    %1 = vector.load %arg2[%c0_1, %c0_2] : memref<1x32xf32, #tpu.memory_space<vmem>>, vector<1x32xf32>
    %c0_3 = arith.constant 0 : index
    %c0_4 = arith.constant 0 : index
    %2 = vector.load %arg3[%c0_3, %c0_4] : memref<1x1xf32, #tpu.memory_space<vmem>>, vector<1x1xf32>
    %c0_5 = arith.constant 0 : index
    %c0_6 = arith.constant 0 : index
    %3 = vector.load %arg4[%c0_5, %c0_6] : memref<8x1xf32, #tpu.memory_space<vmem>>, vector<8x1xf32>
    %4 = vector.broadcast %1 : vector<1x32xf32> to vector<8x32xf32>
    %5 = arith.mulf %0, %4 : vector<8x32xf32>
    %cst = arith.constant dense<0.000000e+00> : vector<8xf32>
    %6 = vector.multi_reduction <add>, %5, %cst [1] : vector<8x32xf32> to vector<8xf32>
    %7 = vector.shape_cast %6 : vector<8xf32> to vector<8x1xf32>
    %8 = vector.broadcast %2 : vector<1x1xf32> to vector<8x1xf32>
    %9 = arith.addf %7, %8 : vector<8x1xf32>
    %cst_7 = arith.constant 0.000000e+00 : f32
    %10 = vector.broadcast %cst_7 : f32 to vector<8x1xf32>
    %11 = arith.subf %10, %9 : vector<8x1xf32>
    %12 = math.exp %11 : vector<8x1xf32>
    %cst_8 = arith.constant 1.000000e+00 : f32
    %13 = vector.broadcast %cst_8 : f32 to vector<8x1xf32>
    %14 = arith.addf %13, %12 : vector<8x1xf32>
    %cst_9 = arith.constant 1.000000e+00 : f32
    %15 = vector.broadcast %cst_9 : f32 to vector<8x1xf32>
    %16 = arith.divf %15, %14 : vector<8x1xf32>
    %cst_10 = arith.constant 0.949999988 : f32
    %17 = vector.broadcast %cst_10 : f32 to vector<8x1xf32>
    %18 = arith.mulf %17, %16 : vector<8x1xf32>
    %cst_11 = arith.constant 2.500000e-03 : f32
    %19 = vector.broadcast %cst_11 : f32 to vector<8x1xf32>
    %20 = arith.addf %18, %19 : vector<8x1xf32>
    %21 = arith.cmpf olt, %3, %20 : vector<8x1xf32>
    %22 = arith.extui %21 : vector<8x1xi1> to vector<8x1xi32>
    %23 = arith.sitofp %22 : vector<8x1xi32> to vector<8x1xf32>
    %24 = math.log %20 : vector<8x1xf32>
    %cst_12 = arith.constant 1.000000e+00 : f32
    %25 = vector.broadcast %cst_12 : f32 to vector<8x1xf32>
    %26 = arith.subf %25, %20 : vector<8x1xf32>
    %27 = math.log %26 : vector<8x1xf32>
    %28 = arith.select %21, %24, %27 : vector<8x1xi1>, vector<8x1xf32>
    %cst_13 = arith.constant 0.000000e+00 : f32
    %29 = vector.broadcast %cst_13 : f32 to vector<8x1xf32>
    %30 = arith.subf %29, %24 : vector<8x1xf32>
    %31 = vector.shape_cast %23 : vector<8x1xf32> to vector<1x8x1xf32>
    %32 = vector.shape_cast %28 : vector<8x1xf32> to vector<1x8x1xf32>
    %33 = vector.shape_cast %30 : vector<8x1xf32> to vector<1x8x1xf32>
    %34 = tpu.concatenate %31, %32, %33 in 0 : vector<1x8x1xf32>, vector<1x8x1xf32>, vector<1x8x1xf32> -> vector<3x8x1xf32>
    %c0_14 = arith.constant 0 : index
    %c0_15 = arith.constant 0 : index
    %c0_16 = arith.constant 0 : index
    %35 = vector.load %arg5[%c0_14, %c0_15, %c0_16] : memref<3x8x1xf32, #tpu.memory_space<vmem>>, vector<3x8x1xf32>
    tpu.vector_store %arg5[%c0_14, %c0_15, %c0_16], %34 {strides = array<i32>} : memref<3x8x1xf32, #tpu.memory_space<vmem>>, vector<3x8x1xf32>,
    return
  }
  func.func @transform_0(%arg0: i32) -> (i32, i32) {
    %c0_i32 = arith.constant 0 : i32
    %c0_i32_0 = arith.constant 0 : i32
    return %arg0, %c0_i32 : i32, i32
  }
  func.func @transform_1(%arg0: i32) -> (i32, i32) {
    %c0_i32 = arith.constant 0 : i32
    %c0_i32_0 = arith.constant 0 : i32
    %c0_i32_1 = arith.constant 0 : i32
    return %c0_i32, %c0_i32_0 : i32, i32
  }
  func.func @transform_2(%arg0: i32) -> (i32, i32) {
    %c0_i32 = arith.constant 0 : i32
    %c0_i32_0 = arith.constant 0 : i32
    %c0_i32_1 = arith.constant 0 : i32
    return %c0_i32, %c0_i32_0 : i32, i32
  }
  func.func @transform_3(%arg0: i32) -> (i32, i32) {
    %c0_i32 = arith.constant 0 : i32
    %c0_i32_0 = arith.constant 0 : i32
    return %arg0, %c0_i32 : i32, i32
  }
  func.func @transform_4(%arg0: i32) -> (i32, i32, i32) {
    %c0_i32 = arith.constant 0 : i32
    %c0_i32_0 = arith.constant 0 : i32
    %c0_i32_1 = arith.constant 0 : i32
    return %c0_i32, %arg0, %c0_i32_0 : i32, i32, i32
  }
}

</mosaic_0001>

<llo_original>
// kernel: controller_forward.1
$region0: #{controller_forward.1}
  #allocation0 [shape = 'u32[]', space=smem, size = 0x4, offset = 0x4, fixed_abs, tag = 'smem constant byte address 0x4 - core index']
  #allocation1 [shape = 'u32[72,128]{1,0:T(1,128)}', space=vmem, size = 0x9000, scoped, tag = 'internal scratch']
  #allocation2 [shape = 'f32[1,1]{1,0:T(1,128)S(1)}', space=vmem, size = 0x200, scoped, tag = 'scoped memory for controller_forward.1']
  %s0 = inlined_call_operand.vmem [shape: f32[8,32], index: 0, kind: input, shape index: {}]
  %s1 = inlined_call_operand.vmem [shape: f32[1,32], index: 1, kind: input, shape index: {}]
  %s2 = inlined_call_operand.<no memory space> [shape: f32[1,1], index: 2, kind: input, shape index: {}]
  %s3 = inlined_call_operand.vmem [shape: f32[8,1], index: 3, kind: input, shape index: {}]
  %s4 = inlined_call_operand.vmem [shape: f32[3,8,1], index: 4, kind: output, shape index: {}]
  %s5 = sld [smem:[#allocation0]]
  $region26: #{controller_forward.1} parent=0
    _
  %s7 = ssub.s32 1, %s5
  %s8 = scalar_select 0, %s7, %s5
  %v9 = vstv %s2
  %10 = vst [vmem:[#allocation2] sm:$0x1] %v9
  // Predicated region
  $region2: #{controller_forward.1} parent=0 // pred_check
    _
  $region3: #{controller_forward.1} parent=0 // pred_check_branch
    %12 = sbr.rel (0) target = $region5
  $region4: #{controller_forward.1} parent=0 // pred_region
    _
  $region5: #{controller_forward.1} parent=0 // pred_fallthru
    _
  // Predicated region
  $region6: #{controller_forward.1} parent=0 // pred_check
    _
  $region7: #{controller_forward.1} parent=0 // pred_check_branch
    %14 = sbr.rel (0) target = $region9
  $region8: #{controller_forward.1} parent=0 // pred_region
    _
  $region9: #{controller_forward.1} parent=0 // pred_fallthru
    _
  // Predicated region
  $region10: #{controller_forward.1} parent=0 // pred_check
    _
  $region11: #{controller_forward.1} parent=0 // pred_check_branch
    %16 = sbr.rel (0) target = $region13
  $region12: #{controller_forward.1} parent=0 // pred_region
    _
  $region13: #{controller_forward.1} parent=0 // pred_fallthru
    _
  // Predicated region
  $region14: #{controller_forward.1} parent=0 // pred_check
    _
  $region15: #{controller_forward.1} parent=0 // pred_check_branch
    %18 = sbr.rel (0) target = $region17
  $region16: #{controller_forward.1} parent=0 // pred_region
    _
  $region17: #{controller_forward.1} parent=0 // pred_fallthru
    _
  %v19 = vld [vmem:[%s0] sm:$0xff]
  %v20 = vld [vmem:[%s1] sm:$0x1]
  %v21 = vld [vmem:[#allocation2] sm:$0x1]
  %v22 = vld [vmem:[%s3] sm:$0xff]
  %v24 = vperm.slane %v20, 0
  %v26 = vmul.f32 %v19, %v24
  %vm27 = vcmask 261120
  %v28 = vsel %vm27, %v26, 0.0
  %29 = vadd.xlane.f32.xlu0 %v28
  %v30 = vpop.xlane.xlu0 %29
  %v32 = vperm.slane %v21, 0
  %v34 = vadd.f32 %v30, %v32
  %v35 = vsub.f32 0.0, %v34
  %v36 = vmul.f32 %v35, 1.442695
  %v37 = vpow.pop %v36
  %v38 = vadd.f32 %v37, 1.0
  %v39 = vrcp.pop %v38
  %v40 = vmul.f32 %v38, %v39
  %v41 = vsub.f32 1.0, %v40
  %v42 = vmul.f32 %v39, %v41
  %v43 = vadd.f32 %v39, %v42
  %vm44 = vweird.f32 %v38
  %vm45 = vweird.f32 %v39
  %vm46 = vmor %vm44, %vm45
  %v47 = vsel %vm46, %v39, %v43
  %v48 = vand.u32 2147483647, %v38
  %vm49 = vcmp.eq.f32.partialorder %v48, 8.507059e+37
  %v50 = vand.u32 %v38, 2147483648
  %v51 = vor.u32 1.1754944e-38, %v50
  %v52 = vsel %vm49, %v51, %v47
  %v53 = vmul.f32 1.0, %v52
  %v54 = vmul.f32 %v53, 0.95
  %v55 = vadd.f32 %v54, 0.0025
  %vm56 = vcmp.lt.f32.partialorder %v22, %v55
  %v57 = vsel %vm56, 1, 0
  %v58 = vcvt.s32.f32 %v57
  %v59 = vlog2.pop %v55
  %v60 = vmul.f32 %v59, 0.6931472
  %v61 = vsub.f32 1.0, %v55
  %v62 = vlog2.pop %v61
  %v63 = vmul.f32 %v62, 0.6931472
  %v64 = vsel %vm56, %v60, %v63
  %v65 = vsub.f32 0.0, %v60
  %vm66 = vcmask 7168
  %67 = vst.msk [vmem:[%s4] sm:$0xff] %vm66, %v58
  %68 = vst.msk [vmem:[%s4 + $0x8] sm:$0xff] %vm66, %v64
  %69 = vst.msk [vmem:[%s4 + $0x10] sm:$0xff] %vm66, %v65
  // Predicated region
  $region18: #{controller_forward.1} parent=0 // pred_check
    _
  $region19: #{controller_forward.1} parent=0 // pred_check_branch
    %71 = sbr.rel (0) target = $region21
  $region20: #{controller_forward.1} parent=0 // pred_region
    _
  $region21: #{controller_forward.1} parent=0 // pred_fallthru
    _
  // Predicated region
  $region22: #{controller_forward.1} parent=0 // pred_check
    _
  $region23: #{controller_forward.1} parent=0 // pred_check_branch
    %73 = sbr.rel (0) target = $region25
  $region24: #{controller_forward.1} parent=0 // pred_region
    _
  $region25: #{controller_forward.1} parent=0 // pred_fallthru
    _

</llo_original>
